<compile_context>
chip_gen: v7x
topology: tpu7x:2x2x1
jax: 0.10.0
libtpu: 0.0.40
codegen_flags: <defaults>
</compile_context>

<pallas_src>
import functools

import jax
import jax.numpy as jnp
from jax.experimental import pallas as pl
from jax.experimental.pallas import tpu as pltpu

_MiB = 1024 * 1024


def _outconv_kernel(x_ref, w_ref, b_ref, o_ref, *, use_mxu):
    # x_ref: (bn, C_in, tn)   lane-dense pixel tile(s), bn images per step
    # w_ref: (C_out, C_in)    full weight matrix (resident across grid steps)
    # b_ref: (C_out, 1)       bias column (broadcast over lanes)
    # o_ref: (bn, C_out, tn)  output tile(s) (lane-dense stores)
    bn, c_in, _ = x_ref.shape
    w = w_ref[...]
    b = b_ref[...].astype(jnp.float32)  # (C_out, 1)

    if use_mxu:
        # Deep contraction: MXU matmul with f32 accumulation, one image of the
        # batch block at a time (only one (C_in, tn) tile's temporaries live).
        for i in range(bn):
            acc = jnp.dot(w, x_ref[i], preferred_element_type=jnp.float32) + b
            o_ref[i] = acc.astype(o_ref.dtype)
    else:
        # Shallow contraction: the MXU would be badly underfilled, so use an
        # unrolled VPU multiply-accumulate. Each term loads one input row
        # straight from the ref (no full-tile f32 upcast lives in VMEM); the
        # multiply stays in the input dtype (native bf16 VALU on v6e/v7x) and
        # accumulation is f32 via promotion against the f32 bias term.
        c_dt = x_ref.dtype
        wv = w.astype(c_dt)  # (C_out, C_in), tiny
        acc = b[None] + wv[None, :, 0:1] * x_ref[:, 0:1, :]
        for ci in range(1, c_in):
            acc = acc + wv[None, :, ci:ci + 1] * x_ref[:, ci:ci + 1, :]
        o_ref[...] = acc.astype(o_ref.dtype)


def _vmem_capacity_bytes():
    """Physical per-core VMEM, with a conservative (v7x-sized) fallback."""
    try:
        info = pltpu.get_tpu_info()
        cap = int(getattr(info, "vmem_capacity_bytes", 0) or 0)
        if cap > 0:
            return cap
    except Exception:
        pass
    return 64 * _MiB


def outconv_pallas(x_nchw, weight, bias, *, tn=None):
    """1x1 conv matching torch.nn.Conv2d(in_ch, out_ch, kernel_size=1).

    x_nchw : (N, C_in, H, W)
    weight : (C_out, C_in, 1, 1)  (PyTorch conv weight layout)
    bias   : (C_out,)
    returns: (N, C_out, H, W)
    """
    N, C_in, H, W = x_nchw.shape
    C_out = weight.shape[0]
    HW = H * W
    dt = x_nchw.dtype
    dt_bytes = jnp.dtype(dt).itemsize

    # Free reshapes only: NCHW is already (C_in, H*W)-contiguous per image.
    x3 = x_nchw.reshape(N, C_in, HW)
    w_mat = weight.reshape(C_out, C_in)
    b_col = bias.reshape(C_out, 1)

    # MXU is worth its push/pop cadence only for deep-enough contractions.
    use_mxu = (2 * C_in * C_out) >= 256

    # ---- generation-aware VMEM budget --------------------------------------
    vmem_cap = _vmem_capacity_bytes()
    tile_budget = vmem_cap // 2  # ~64 MiB on v5e/v6e, ~32 MiB on v7x

    # VMEM bytes per output lane (pixel) of a grid step:
    #   double-buffered input + output tiles, f32 accumulator (counted twice
    #   for ping-pong temporaries), and the per-row upcast / dot temporaries.
    bytes_per_lane = 2 * (C_in + C_out) * dt_bytes + 8 * C_out + 8
    max_lanes = max(128, tile_budget // bytes_per_lane)

    # ---- tile selection -----------------------------------------------------
    if tn is not None:
        tn = int(max(128, (tn // 128) * 128))
        if tn >= HW:
            tn = HW
        bn = 1
    elif max_lanes >= HW:
        # Whole image fits in one lane tile: block the batch axis too so a
        # single grid step streams bn images (amortises the fixed per-step
        # cost and keeps DMAs large).
        tn = HW
        bn_max = max(1, min(N, max_lanes // max(HW, 1)))
        if use_mxu:
            bn_max = min(bn_max, 32)  # bound the unrolled per-image MXU loop
        bn = 1
        for cand in range(bn_max, 0, -1):  # largest bn that divides N
            if N % cand == 0:
                bn = cand
                break
    else:
        # Large image: biggest 128-multiple lane tile that fits the budget;
        # the ragged last block along HW is handled by Pallas (masked stores).
        tn = max(128, (max_lanes // 128) * 128)
        bn = 1

    grid = (pl.cdiv(N, bn), pl.cdiv(HW, tn))

    # ---- scoped-VMEM limit & scheduling hint --------------------------------
    est_vmem = bn * tn * bytes_per_lane + 4 * C_out * (C_in + 1)
    vmem_limit = int(min(vmem_cap - 4 * _MiB, est_vmem + 8 * _MiB))
    vmem_limit = int(max(vmem_limit, 32 * _MiB))

    cost = pl.CostEstimate(
        flops=2 * N * C_out * C_in * HW,
        transcendentals=0,
        bytes_accessed=dt_bytes * N * (C_in + C_out) * HW
        + 4 * C_out * (C_in + 1),
    )

    kernel = functools.partial(_outconv_kernel, use_mxu=use_mxu)

    y3 = pl.pallas_call(
        kernel,
        out_shape=jax.ShapeDtypeStruct((N, C_out, HW), dt),
        grid_spec=pltpu.PrefetchScalarGridSpec(
            num_scalar_prefetch=0,
            grid=grid,
            in_specs=[
                # Activation tile: bn images, pixels lane-dense.
                pl.BlockSpec((bn, C_in, tn), lambda n, j: (n, 0, j)),
                # Weight / bias: constant index maps -> resident in VMEM.
                pl.BlockSpec((C_out, C_in), lambda n, j: (0, 0)),
                pl.BlockSpec((C_out, 1), lambda n, j: (0, 0)),
            ],
            out_specs=pl.BlockSpec((bn, C_out, tn), lambda n, j: (n, 0, j)),
        ),
        compiler_params=pltpu.CompilerParams(
            # Both axes independent -> shardable across the 2 TCs on v7x.
            dimension_semantics=("parallel", "parallel"),
            vmem_limit_bytes=vmem_limit,
        ),
        cost_estimate=cost,
    )(x3, w_mat, b_col)

    # Output is already NCHW; this reshape is free.
    return y3.reshape(N, C_out, H, W)


def outconv_reference(x_nchw, weight, bias):
    """Pure-JAX reference for the 1x1 conv."""
    w_mat = weight.reshape(weight.shape[0], weight.shape[1])  # (C_out, C_in)
    y = jnp.einsum("nchw,oc->nohw", x_nchw, w_mat) + bias[None, :, None, None]
    return y.astype(x_nchw.dtype)


if __name__ == "__main__":
    key = jax.random.PRNGKey(0)
    k_x, k_w, k_b = jax.random.split(key, 3)

    N, C_in, C_out, H, W = 2, 4, 3, 16, 16

    x = jax.random.normal(k_x, (N, C_in, H, W), dtype=jnp.float32)

    # Deterministic parameter init mimicking PyTorch Conv2d default
    # (uniform in [-1/sqrt(fan_in), 1/sqrt(fan_in)], fan_in = C_in * 1 * 1).
    bound = 1.0 / jnp.sqrt(jnp.float32(C_in))
    weight = jax.random.uniform(
        k_w, (C_out, C_in, 1, 1), dtype=jnp.float32, minval=-bound, maxval=bound
    )
    bias = jax.random.uniform(
        k_b, (C_out,), dtype=jnp.float32, minval=-bound, maxval=bound
    )

    y = outconv_pallas(x, weight, bias)
    y = jax.block_until_ready(y)

    y_ref = outconv_reference(x, weight, bias)
    assert y.shape == (N, C_out, H, W), y.shape
    assert jnp.allclose(y, y_ref, atol=1e-5, rtol=1e-5), (
        float(jnp.max(jnp.abs(y - y_ref)))
    )

    print("KERNEL_OK")
</pallas_src>

<mosaic_0001>
module attributes {stable_mosaic.version = 11 : i64} {
  func.func @_outconv_kernel(%arg0: i32, %arg1: i32, %arg2: memref<2x4x256xf32, #tpu.memory_space<vmem>>, %arg3: memref<3x4xf32, #tpu.memory_space<vmem>>, %arg4: memref<3x1xf32, #tpu.memory_space<vmem>>, %arg5: memref<2x3x256xf32, #tpu.memory_space<vmem>>) attributes {dimension_semantics = [#tpu.dimension_semantics<parallel>, #tpu.dimension_semantics<parallel>], iteration_bounds = array<i64: 1, 1>, scalar_prefetch = 0 : i64, scratch_operands = 0 : i64, tpu.core_type = #tpu.core_type<tc>, window_params = [{transform_indices = @transform_0, window_bounds = array<i64: 2, 4, 256>}, {pipeline_mode = #tpu.pipeline_mode<synchronous>, transform_indices = @transform_1, window_bounds = array<i64: 3, 4>}, {pipeline_mode = #tpu.pipeline_mode<synchronous>, transform_indices = @transform_2, window_bounds = array<i64: 3, 1>}, {transform_indices = @transform_3, window_bounds = array<i64: 2, 3, 256>}]} {
    %c0 = arith.constant 0 : index
    %c0_0 = arith.constant 0 : index
    %0 = vector.load %arg3[%c0, %c0_0] : memref<3x4xf32, #tpu.memory_space<vmem>>, vector<3x4xf32>
    %c0_1 = arith.constant 0 : index
    %c0_2 = arith.constant 0 : index
    %1 = vector.load %arg4[%c0_1, %c0_2] : memref<3x1xf32, #tpu.memory_space<vmem>>, vector<3x1xf32>
    %2 = vector.shape_cast %1 : vector<3x1xf32> to vector<1x3x1xf32>
    %3 = vector.extract_strided_slice %0 {offsets = [0, 0], sizes = [3, 1], strides = [1, 1]} : vector<3x4xf32> to vector<3x1xf32>
    %4 = vector.shape_cast %3 : vector<3x1xf32> to vector<1x3x1xf32>
    %c0_3 = arith.constant 0 : index
    %c0_4 = arith.constant 0 : index
    %c0_5 = arith.constant 0 : index
    %5 = vector.load %arg2[%c0_3, %c0_4, %c0_5] : memref<2x4x256xf32, #tpu.memory_space<vmem>>, vector<2x1x256xf32>
    %6 = vector.broadcast %4 : vector<1x3x1xf32> to vector<2x3x256xf32>
    %7 = vector.broadcast %5 : vector<2x1x256xf32> to vector<2x3x256xf32>
    %8 = arith.mulf %6, %7 : vector<2x3x256xf32>
    %9 = vector.broadcast %2 : vector<1x3x1xf32> to vector<2x3x256xf32>
    %10 = arith.addf %9, %8 : vector<2x3x256xf32>
    %11 = vector.extract_strided_slice %0 {offsets = [0, 1], sizes = [3, 1], strides = [1, 1]} : vector<3x4xf32> to vector<3x1xf32>
    %12 = vector.shape_cast %11 : vector<3x1xf32> to vector<1x3x1xf32>
    %c0_6 = arith.constant 0 : index
    %c1 = arith.constant 1 : index
    %c0_7 = arith.constant 0 : index
    %13 = vector.load %arg2[%c0_6, %c1, %c0_7] : memref<2x4x256xf32, #tpu.memory_space<vmem>>, vector<2x1x256xf32>
    %14 = vector.broadcast %12 : vector<1x3x1xf32> to vector<2x3x256xf32>
    %15 = vector.broadcast %13 : vector<2x1x256xf32> to vector<2x3x256xf32>
    %16 = arith.mulf %14, %15 : vector<2x3x256xf32>
    %17 = arith.addf %10, %16 : vector<2x3x256xf32>
    %18 = vector.extract_strided_slice %0 {offsets = [0, 2], sizes = [3, 1], strides = [1, 1]} : vector<3x4xf32> to vector<3x1xf32>
    %19 = vector.shape_cast %18 : vector<3x1xf32> to vector<1x3x1xf32>
    %c0_8 = arith.constant 0 : index
    %c2 = arith.constant 2 : index
    %c0_9 = arith.constant 0 : index
    %20 = vector.load %arg2[%c0_8, %c2, %c0_9] : memref<2x4x256xf32, #tpu.memory_space<vmem>>, vector<2x1x256xf32>
    %21 = vector.broadcast %19 : vector<1x3x1xf32> to vector<2x3x256xf32>
    %22 = vector.broadcast %20 : vector<2x1x256xf32> to vector<2x3x256xf32>
    %23 = arith.mulf %21, %22 : vector<2x3x256xf32>
    %24 = arith.addf %17, %23 : vector<2x3x256xf32>
    %25 = vector.extract_strided_slice %0 {offsets = [0, 3], sizes = [3, 1], strides = [1, 1]} : vector<3x4xf32> to vector<3x1xf32>
    %26 = vector.shape_cast %25 : vector<3x1xf32> to vector<1x3x1xf32>
    %c0_10 = arith.constant 0 : index
    %c3 = arith.constant 3 : index
    %c0_11 = arith.constant 0 : index
    %27 = vector.load %arg2[%c0_10, %c3, %c0_11] : memref<2x4x256xf32, #tpu.memory_space<vmem>>, vector<2x1x256xf32>
    %28 = vector.broadcast %26 : vector<1x3x1xf32> to vector<2x3x256xf32>
    %29 = vector.broadcast %27 : vector<2x1x256xf32> to vector<2x3x256xf32>
    %30 = arith.mulf %28, %29 : vector<2x3x256xf32>
    %31 = arith.addf %24, %30 : vector<2x3x256xf32>
    %c0_12 = arith.constant 0 : index
    %c0_13 = arith.constant 0 : index
    %c0_14 = arith.constant 0 : index
    %32 = vector.load %arg5[%c0_12, %c0_13, %c0_14] : memref<2x3x256xf32, #tpu.memory_space<vmem>>, vector<2x3x256xf32>
    tpu.vector_store %arg5[%c0_12, %c0_13, %c0_14], %31 {strides = array<i32>} : memref<2x3x256xf32, #tpu.memory_space<vmem>>, vector<2x3x256xf32>,
    return
  }
  func.func @transform_0(%arg0: i32, %arg1: i32) -> (i32, i32, i32) {
    %c0_i32 = arith.constant 0 : i32
    %c0_i32_0 = arith.constant 0 : i32
    return %arg0, %c0_i32, %arg1 : i32, i32, i32
  }
  func.func @transform_1(%arg0: i32, %arg1: i32) -> (i32, i32) {
    %c0_i32 = arith.constant 0 : i32
    %c0_i32_0 = arith.constant 0 : i32
    %c0_i32_1 = arith.constant 0 : i32
    return %c0_i32, %c0_i32_0 : i32, i32
  }
  func.func @transform_2(%arg0: i32, %arg1: i32) -> (i32, i32) {
    %c0_i32 = arith.constant 0 : i32
    %c0_i32_0 = arith.constant 0 : i32
    %c0_i32_1 = arith.constant 0 : i32
    return %c0_i32, %c0_i32_0 : i32, i32
  }
  func.func @transform_3(%arg0: i32, %arg1: i32) -> (i32, i32, i32) {
    %c0_i32 = arith.constant 0 : i32
    %c0_i32_0 = arith.constant 0 : i32
    return %arg0, %c0_i32, %arg1 : i32, i32, i32
  }
}

</mosaic_0001>

<llo_original>
// kernel: tpu_custom_call.1
$region0: #{tpu_custom_call.1}
  #allocation0 [shape = 'u32[]', space=smem, size = 0x4, offset = 0x4, fixed_abs, tag = 'smem constant byte address 0x4 - core index']
  #allocation1 [shape = 'u32[144,128]{1,0:T(1,128)}', space=vmem, size = 0x12000, scoped, tag = 'internal scratch']
  %s0 = inlined_call_operand.hbm [shape: f32[2,4,256], index: 0, kind: input, shape index: {}]
  %s1 = inlined_call_operand.vmem [shape: f32[3,4], index: 1, kind: input, shape index: {}]
  %s2 = inlined_call_operand.vmem [shape: f32[3,1], index: 2, kind: input, shape index: {}]
  %s3 = inlined_call_operand.vmem [shape: f32[2,3,256], index: 3, kind: output, shape index: {}]
  %s4 = sld [smem:[#allocation0]]
  $region26: #{tpu_custom_call.1} parent=0
    _
  %s6 = ssub.s32 1, %s4
  %s7 = scalar_select 0, %s6, %s4
  $region1: #{tpu_custom_call.1} parent=0
    #allocation2 [shape = 'u8[8192]{0}', space=vmem, size = 0x2000, scoped, tag = 'input window, operand 0, single buffered']
    #allocation3 [shape = 's32[1]{0}', space=sflag, size = 0x4, scoped, tag = 'scoped memory for tpu_custom_call.1']
    %8 = vsyncpa [#allocation3], 0
    // Predicated region
    $region2: #{tpu_custom_call.1} parent=1 // pred_check
      _
    $region3: #{tpu_custom_call.1} parent=1 // pred_check_branch
      %10 = sbr.rel (0) target = $region5
    $region4: #{tpu_custom_call.1} parent=1 // pred_region
      %s12 = ssub.s32 256, 256
      %13 = vsyncadd [#allocation3], %s12
      %s14 = sshll.u32 [#allocation2], 4
      %s15 = int_to_ptr.vmem [resolvable:$true] %s14
      %20 = dma.hbm_to_vmem [thread:$0]  %s0, 256, %s15, [#allocation3], 128, 128, 8
    $region5: #{tpu_custom_call.1} parent=1 // pred_fallthru
      _
    // Predicated region
    $region6: #{tpu_custom_call.1} parent=1 // pred_check
      _
    $region7: #{tpu_custom_call.1} parent=1 // pred_check_branch
      %22 = sbr.rel (0) target = $region9
    $region8: #{tpu_custom_call.1} parent=1 // pred_region
      _
    $region9: #{tpu_custom_call.1} parent=1 // pred_fallthru
      _
    // Predicated region
    $region10: #{tpu_custom_call.1} parent=1 // pred_check
      _
    $region11: #{tpu_custom_call.1} parent=1 // pred_check_branch
      %24 = sbr.rel (0) target = $region13
    $region12: #{tpu_custom_call.1} parent=1 // pred_region
      _
    $region13: #{tpu_custom_call.1} parent=1 // pred_fallthru
      _
    // Predicated region
    $region14: #{tpu_custom_call.1} parent=1 // pred_check
      _
    $region15: #{tpu_custom_call.1} parent=1 // pred_check_branch
      %26 = sbr.rel (0) target = $region17
    $region16: #{tpu_custom_call.1} parent=1 // pred_region
      %27 = dma.done [#allocation3], 256
    $region17: #{tpu_custom_call.1} parent=1 // pred_fallthru
      _
    %v28 = vld [vmem:[%s1] sm:$0x7]
    %v29 = vld [vmem:[%s2] sm:$0x7]
    %v30 = vld [vmem:[#allocation2] ss:$4 sm:$0x3]
    %s31 = scalar_lea.vmem [#allocation2], 8
    %v32 = vld [vmem:[%s31] ss:$4 sm:$0x3]
    %34 = vset.pattern.permute.xlu0 0
    %35 = vperm.xlu0 %34, %v28
    %v36 = vpop.permute.xlu0 %35
    %v40 = vlaneseq
    %v41 = vshrl.u32 %v40, 7
    %v42 = vsub.s32 0, %v41
    %v43 = vrot.slane %v30, %v42
    %v44 = vlaneseq
    %v45 = vshrl.u32 %v44, 7
    %v46 = vsub.s32 1, %v45
    %v47 = vrot.slane %v30, %v46
    %v48 = vlaneseq
    %v49 = vshrl.u32 %v48, 7
    %v50 = vsub.s32 0, %v49
    %v51 = vrot.slane %v32, %v50
    %v52 = vlaneseq
    %v53 = vshrl.u32 %v52, 7
    %v54 = vsub.s32 1, %v53
    %v55 = vrot.slane %v32, %v54
    %v60 = vmul.f32 %v36, %v43
    %v61 = vmul.f32 %v36, %v47
    %v62 = vmul.f32 %v36, %v51
    %v63 = vmul.f32 %v36, %v55
    %65 = vset.pattern.permute.xlu0 0
    %66 = vperm.xlu0 %65, %v29
    %v67 = vpop.permute.xlu0 %66
    %v69 = vadd.f32 %v67, %v60
    %v70 = vadd.f32 %v67, %v61
    %v71 = vadd.f32 %v67, %v62
    %v72 = vadd.f32 %v67, %v63
    %s73 = scalar_lea.vmem [#allocation2], 1
    %v74 = vld [vmem:[%s73] ss:$4 sm:$0x3]
    %s75 = scalar_lea.vmem [#allocation2], 9
    %v76 = vld [vmem:[%s75] ss:$4 sm:$0x3]
    %77 = vset.pattern.permute.xlu0 1
    %78 = vperm.xlu0 %77, %v28
    %v79 = vpop.permute.xlu0 %78
    %v83 = vlaneseq
    %v84 = vshrl.u32 %v83, 7
    %v85 = vsub.s32 0, %v84
    %v86 = vrot.slane %v74, %v85
    %v87 = vlaneseq
    %v88 = vshrl.u32 %v87, 7
    %v89 = vsub.s32 1, %v88
    %v90 = vrot.slane %v74, %v89
    %v91 = vlaneseq
    %v92 = vshrl.u32 %v91, 7
    %v93 = vsub.s32 0, %v92
    %v94 = vrot.slane %v76, %v93
    %v95 = vlaneseq
    %v96 = vshrl.u32 %v95, 7
    %v97 = vsub.s32 1, %v96
    %v98 = vrot.slane %v76, %v97
    %v103 = vmul.f32 %v79, %v86
    %v104 = vmul.f32 %v79, %v90
    %v105 = vmul.f32 %v79, %v94
    %v106 = vmul.f32 %v79, %v98
    %v107 = vadd.f32 %v69, %v103
    %v108 = vadd.f32 %v70, %v104
    %v109 = vadd.f32 %v71, %v105
    %v110 = vadd.f32 %v72, %v106
    %s111 = scalar_lea.vmem [#allocation2], 2
    %v112 = vld [vmem:[%s111] ss:$4 sm:$0x3]
    %s113 = scalar_lea.vmem [#allocation2], 10
    %v114 = vld [vmem:[%s113] ss:$4 sm:$0x3]
    %115 = vset.pattern.permute.xlu0 2
    %116 = vperm.xlu0 %115, %v28
    %v117 = vpop.permute.xlu0 %116
    %v121 = vlaneseq
    %v122 = vshrl.u32 %v121, 7
    %v123 = vsub.s32 0, %v122
    %v124 = vrot.slane %v112, %v123
    %v125 = vlaneseq
    %v126 = vshrl.u32 %v125, 7
    %v127 = vsub.s32 1, %v126
    %v128 = vrot.slane %v112, %v127
    %v129 = vlaneseq
    %v130 = vshrl.u32 %v129, 7
    %v131 = vsub.s32 0, %v130
    %v132 = vrot.slane %v114, %v131
    %v133 = vlaneseq
    %v134 = vshrl.u32 %v133, 7
    %v135 = vsub.s32 1, %v134
    %v136 = vrot.slane %v114, %v135
    %v141 = vmul.f32 %v117, %v124
    %v142 = vmul.f32 %v117, %v128
    %v143 = vmul.f32 %v117, %v132
    %v144 = vmul.f32 %v117, %v136
    %v145 = vadd.f32 %v107, %v141
    %v146 = vadd.f32 %v108, %v142
    %v147 = vadd.f32 %v109, %v143
    %v148 = vadd.f32 %v110, %v144
    %s149 = scalar_lea.vmem [#allocation2], 3
    %v150 = vld [vmem:[%s149] ss:$4 sm:$0x3]
    %s151 = scalar_lea.vmem [#allocation2], 11
    %v152 = vld [vmem:[%s151] ss:$4 sm:$0x3]
    %153 = vset.pattern.permute.xlu0 3
    %154 = vperm.xlu0 %153, %v28
    %v155 = vpop.permute.xlu0 %154
    %v159 = vlaneseq
    %v160 = vshrl.u32 %v159, 7
    %v161 = vsub.s32 0, %v160
    %v162 = vrot.slane %v150, %v161
    %v163 = vlaneseq
    %v164 = vshrl.u32 %v163, 7
    %v165 = vsub.s32 1, %v164
    %v166 = vrot.slane %v150, %v165
    %v167 = vlaneseq
    %v168 = vshrl.u32 %v167, 7
    %v169 = vsub.s32 0, %v168
    %v170 = vrot.slane %v152, %v169
    %v171 = vlaneseq
    %v172 = vshrl.u32 %v171, 7
    %v173 = vsub.s32 1, %v172
    %v174 = vrot.slane %v152, %v173
    %v179 = vmul.f32 %v155, %v162
    %v180 = vmul.f32 %v155, %v166
    %v181 = vmul.f32 %v155, %v170
    %v182 = vmul.f32 %v155, %v174
    %v183 = vadd.f32 %v145, %v179
    %v184 = vadd.f32 %v146, %v180
    %v185 = vadd.f32 %v147, %v181
    %v186 = vadd.f32 %v148, %v182
    %v191 = vcombine.low %v183, %v184
    %v192 = vcombine.low %v185, %v186
    %195 = vst [vmem:[%s3] sm:$0x77] %v191
    %196 = vst [vmem:[%s3 + $0x8] sm:$0x77] %v192
    // Predicated region
    $region18: #{tpu_custom_call.1} parent=1 // pred_check
      _
    $region19: #{tpu_custom_call.1} parent=1 // pred_check_branch
      %198 = sbr.rel (0) target = $region21
    $region20: #{tpu_custom_call.1} parent=1 // pred_region
      _
    $region21: #{tpu_custom_call.1} parent=1 // pred_fallthru
      _
    // Predicated region
    $region22: #{tpu_custom_call.1} parent=1 // pred_check
      _
    $region23: #{tpu_custom_call.1} parent=1 // pred_check_branch
      %200 = sbr.rel (0) target = $region25
    $region24: #{tpu_custom_call.1} parent=1 // pred_region
      _
    $region25: #{tpu_custom_call.1} parent=1 // pred_fallthru
      _
    %201 = vsyncpa [#allocation3], 1

</llo_original>
